<compile_context>
chip_gen: v7x
topology: tpu7x:2x2x1
jax: 0.10.0
libtpu: 0.0.40
codegen_flags: <defaults>
</compile_context>

<pallas_src>
import jax
import jax.numpy as jnp
from jax.experimental import pallas as pl
from jax.experimental.pallas import tpu as pltpu

LANE = 128       # lane (last-dim) tile width
SUBLANE = 8      # f32 sublane tile
_RESIDENT_WEIGHT_LIMIT = 4 * 1024 * 1024   # weights <= 4 MiB -> keep fully resident in VMEM


def _round_up(x, m):
    return (x + m - 1) // m * m


def _tpu_vmem_capacity_bytes():
    try:
        cap = getattr(pltpu.get_tpu_info(), "vmem_capacity_bytes", None)
        if cap:
            return int(cap)
    except Exception:
        pass
    return 64 * 1024 * 1024   # conservative fallback (v7x per-TensorCore VMEM)


# ----------------------------------------------------------------------------------------------
# Path A: small model, all weights resident in VMEM, grid = (batch_tiles,)
# ----------------------------------------------------------------------------------------------
def _make_resident_kernel(num_hidden_layers):
    def kernel(x_ref, w_in_ref, w_hid_ref, w_out_ref,
               b_in_ref, b_hid_ref, b_out_ref, o_ref):
        # Input layer (ragged K = fin_p) + ReLU.
        h = jnp.dot(x_ref[...].astype(w_in_ref.dtype), w_in_ref[...],
                    preferred_element_type=jnp.float32)
        h = jnp.maximum(h + b_in_ref[...], 0.0)
        # Hidden layers (static unroll; num_hidden_layers is a Python int and small here).
        for i in range(num_hidden_layers):
            h = jnp.dot(h.astype(w_hid_ref.dtype), w_hid_ref[i],
                        preferred_element_type=jnp.float32)
            h = jnp.maximum(h + b_hid_ref[i], 0.0)
        # Output layer (ragged N = fout_p), no ReLU.
        out = jnp.dot(h.astype(w_out_ref.dtype), w_out_ref[...],
                      preferred_element_type=jnp.float32)
        o_ref[...] = (out + b_out_ref[...]).astype(o_ref.dtype)
    return kernel


def _fused_mlp_resident(x_pad, w_in, w_hid, w_out, b_in, b_hid, b_out,
                        *, tile_b, num_hidden_layers, vmem_limit):
    bp, fin_p = x_pad.shape
    h_p = w_in.shape[1]
    fout_p = w_out.shape[1]
    n_stack = w_hid.shape[0]

    return pl.pallas_call(
        _make_resident_kernel(num_hidden_layers),
        out_shape=jax.ShapeDtypeStruct((bp, fout_p), x_pad.dtype),
        grid_spec=pltpu.PrefetchScalarGridSpec(
            num_scalar_prefetch=0,
            grid=(bp // tile_b,),
            in_specs=[
                pl.BlockSpec((tile_b, fin_p), lambda b: (b, 0)),
                # All weights/biases: full-array resident blocks (DMAed once, constant index).
                pl.BlockSpec((fin_p, h_p), lambda b: (0, 0)),
                pl.BlockSpec((n_stack, h_p, h_p), lambda b: (0, 0, 0)),
                pl.BlockSpec((h_p, fout_p), lambda b: (0, 0)),
                pl.BlockSpec((1, h_p), lambda b: (0, 0)),
                pl.BlockSpec((n_stack, 1, h_p), lambda b: (0, 0, 0)),
                pl.BlockSpec((1, fout_p), lambda b: (0, 0)),
            ],
            out_specs=pl.BlockSpec((tile_b, fout_p), lambda b: (b, 0)),
        ),
        compiler_params=pltpu.CompilerParams(
            dimension_semantics=("parallel",),
            vmem_limit_bytes=vmem_limit,
        ),
    )(x_pad, w_in, w_hid, w_out, b_in, b_hid, b_out)


# ----------------------------------------------------------------------------------------------
# Path B: streamed hidden weights, grid = (batch_tiles, layers, n_tiles)
# ----------------------------------------------------------------------------------------------
def _make_stream_kernel(n_slots, tile_n):
    def kernel(x_ref, w_in_ref, w_hid_ref, w_out_ref,
               b_in_ref, b_hid_ref, b_out_ref, o_ref, act_ref):
        l = pl.program_id(1)
        n = pl.program_id(2)
        num_layers = pl.num_programs(1)
        col = pl.multiple_of(n * tile_n, LANE)

        # Layer l writes activation slot l % n_slots and reads slot (l-1) % n_slots.
        # n_slots == 1 when a layer is produced in a single N tile (the read of the old
        # activation then fully precedes the in-place overwrite).
        wslot = l % n_slots
        rslot = (l + 1) % n_slots
        is_last = l == num_layers - 1

        @pl.when(l == 0)
        def _():   # input layer (ragged K = fin_p) + ReLU, one N tile per grid step
            w = w_in_ref[:, pl.ds(col, tile_n)]
            acc = jnp.dot(x_ref[...].astype(w.dtype), w,
                          preferred_element_type=jnp.float32)
            acc = acc + b_in_ref[:, pl.ds(col, tile_n)]
            act_ref[wslot, :, pl.ds(col, tile_n)] = jnp.maximum(acc, 0.0)

        @pl.when((l > 0) & jnp.logical_not(is_last))
        def _():   # hidden layer l-1: streamed [H_p, tile_n] weight block + ReLU
            w = w_hid_ref[0]                                   # [h_p, tile_n]
            acc = jnp.dot(act_ref[rslot].astype(w.dtype), w,
                          preferred_element_type=jnp.float32)
            acc = acc + b_hid_ref[0]                           # [1, tile_n]
            act_ref[wslot, :, pl.ds(col, tile_n)] = jnp.maximum(acc, 0.0)

        @pl.when(is_last & (n == 0))
        def _():   # output layer (ragged N = fout_p), no ReLU
            acc = jnp.dot(act_ref[rslot].astype(w_out_ref.dtype), w_out_ref[...],
                          preferred_element_type=jnp.float32)
            o_ref[...] = (acc + b_out_ref[...]).astype(o_ref.dtype)
    return kernel


def _fused_mlp_stream(x_pad, w_in, w_hid, w_out, b_in, b_hid, b_out,
                      *, num_layers, tile_b, n_tiles, vmem_limit):
    bp, fin_p = x_pad.shape
    h_p = w_in.shape[1]
    fout_p = w_out.shape[1]
    n_stack = w_hid.shape[0]
    tile_n = h_p // n_tiles
    n_slots = 2 if n_tiles > 1 else 1

    def whid_index(b, l, n):
        # Hidden layer l (1..L-2) uses stacked weight l-1.
        li = jnp.maximum(jnp.minimum(l - 1, n_stack - 1), 0)
        # Freeze the N index on the boundary layers (which do not consume the hidden weight)
        # so the adjacent hidden layer's weight is not re-streamed.
        ni = jnp.where(l == 0, 0, jnp.where(l == num_layers - 1, n_tiles - 1, n))
        return (li, 0, ni)

    return pl.pallas_call(
        _make_stream_kernel(n_slots, tile_n),
        out_shape=jax.ShapeDtypeStruct((bp, fout_p), x_pad.dtype),
        grid_spec=pltpu.PrefetchScalarGridSpec(
            num_scalar_prefetch=0,
            grid=(bp // tile_b, num_layers, n_tiles),
            in_specs=[
                # x tile: depends only on the batch index -> resident across (layer, n).
                pl.BlockSpec((tile_b, fin_p), lambda b, l, n: (b, 0)),
                # Input-layer weight: resident (small, ragged K).
                pl.BlockSpec((fin_p, h_p), lambda b, l, n: (0, 0)),
                # Hidden weights: one (layer, N-tile) block streamed per grid step.
                # (If a bundle dump shows exposed DMA waits on v6e, consider
                #  pipeline_mode=pl.Buffered(3) here - costs another h_p*tile_n*bytes of VMEM.)
                pl.BlockSpec((1, h_p, tile_n), whid_index),
                # Output-layer weight: resident (ragged N).
                pl.BlockSpec((h_p, fout_p), lambda b, l, n: (0, 0)),
                # Biases: input/output resident; hidden streamed alongside its weight block.
                pl.BlockSpec((1, h_p), lambda b, l, n: (0, 0)),
                pl.BlockSpec((1, 1, tile_n), whid_index),
                pl.BlockSpec((1, fout_p), lambda b, l, n: (0, 0)),
            ],
            out_specs=pl.BlockSpec((tile_b, fout_p), lambda b, l, n: (b, 0)),
            scratch_shapes=[pltpu.VMEM((n_slots, tile_b, h_p), jnp.float32)],
        ),
        compiler_params=pltpu.CompilerParams(
            dimension_semantics=("parallel", "arbitrary", "arbitrary"),
            vmem_limit_bytes=vmem_limit,
        ),
    )(x_pad, w_in, w_hid, w_out, b_in, b_hid, b_out)


# ----------------------------------------------------------------------------------------------
# Module wrapper
# ----------------------------------------------------------------------------------------------
class FeedForwardNetPallas:
    """JAX/Pallas port of the PyTorch FeedForwardNet (fused single-kernel forward)."""

    def __init__(self, input_features, num_hidden_layers, num_hidden, output_features,
                 key, weight_dtype=jnp.bfloat16, mode="auto", n_tiles=None, tile_b=None):
        assert mode in ("auto", "resident", "stream")
        self.input_features = input_features
        self.output_features = output_features
        self.num_hidden_layers = num_hidden_layers
        self.weight_dtype = weight_dtype
        self.mode = mode
        self.n_tiles = n_tiles        # optional override (testing / tuning)
        self.tile_b = tile_b          # optional override (testing / tuning)

        def init_linear(k, fan_in, fan_out):
            # PyTorch-Linear-style uniform(-1/sqrt(fan_in), 1/sqrt(fan_in)).
            kw, kb = jax.random.split(k)
            bound = 1.0 / (fan_in ** 0.5)
            w = jax.random.uniform(kw, (fan_in, fan_out), jnp.float32, minval=-bound, maxval=bound)
            b = jax.random.uniform(kb, (fan_out,), jnp.float32, minval=-bound, maxval=bound)
            return w, b

        keys = jax.random.split(key, num_hidden_layers + 2)
        self.params = [init_linear(keys[0], input_features, num_hidden)]
        for i in range(num_hidden_layers):
            self.params.append(init_linear(keys[1 + i], num_hidden, num_hidden))
        self.params.append(init_linear(keys[-1], num_hidden, output_features))

        # Per-layer ragged padding (each feature dim rounded to 128 independently).
        self.fin_p = _round_up(input_features, LANE)
        self.h_p = _round_up(num_hidden, LANE)
        self.fout_p = _round_up(output_features, LANE)
        n_stack = max(num_hidden_layers, 1)   # dummy zero layer when there are no hidden layers

        w0, b0 = self.params[0]
        w_in = jnp.zeros((self.fin_p, self.h_p), jnp.float32)
        w_in = w_in.at[:input_features, :num_hidden].set(w0)
        b_in = jnp.zeros((1, self.h_p), jnp.float32).at[0, :num_hidden].set(b0)

        w_hid = jnp.zeros((n_stack, self.h_p, self.h_p), jnp.float32)
        b_hid = jnp.zeros((n_stack, 1, self.h_p), jnp.float32)
        for i in range(num_hidden_layers):
            w, b = self.params[1 + i]
            w_hid = w_hid.at[i, :num_hidden, :num_hidden].set(w)
            b_hid = b_hid.at[i, 0, :num_hidden].set(b)

        wl, bl = self.params[-1]
        w_out = jnp.zeros((self.h_p, self.fout_p), jnp.float32)
        w_out = w_out.at[:num_hidden, :output_features].set(wl)
        b_out = jnp.zeros((1, self.fout_p), jnp.float32).at[0, :output_features].set(bl)

        # Zero padding keeps the math exact: padded columns stay 0 through every layer
        # (0 * w = 0, bias pad 0, relu(0) = 0) and padded output columns are sliced off.
        self.w_in = w_in.astype(weight_dtype)
        self.w_hid = w_hid.astype(weight_dtype)
        self.w_out = w_out.astype(weight_dtype)
        self.b_in, self.b_hid, self.b_out = b_in, b_hid, b_out   # biases stay f32

    # ---- VMEM-budget-driven planning -----------------------------------------------------
    def _plan(self, B):
        cap = _tpu_vmem_capacity_bytes()
        budget = int(cap * 0.7)            # allocation budget (headroom for compiler scratch)
        vmem_limit = int(cap * 0.8)
        wb = jnp.dtype(self.weight_dtype).itemsize
        fin_p, h_p, fout_p = self.fin_p, self.h_p, self.fout_p
        n_stack = max(self.num_hidden_layers, 1)

        resident_bytes = ((fin_p * h_p + n_stack * h_p * h_p + h_p * fout_p) * wb
                          + (h_p + n_stack * h_p + fout_p) * 4)
        if self.mode == "resident":
            use_resident = True
        elif self.mode == "stream":
            use_resident = False
        else:
            use_resident = (resident_bytes <= _RESIDENT_WEIGHT_LIMIT
                            and self.num_hidden_layers <= 16)

        if use_resident:
            per_row = 4 * (2 * fin_p + 2 * fout_p + 2 * h_p)     # x/out double buffers + live act
            cap_rows = max((budget - resident_bytes) // per_row, SUBLANE)
            tile_b = self.tile_b or min(512, _round_up(B, SUBLANE),
                                        cap_rows // SUBLANE * SUBLANE)
            tile_b = max(_round_up(tile_b, SUBLANE), SUBLANE)
            return dict(resident=True, tile_b=tile_b, n_tiles=1, vmem_limit=vmem_limit)

        # Streamed path: choose N-tiling so the double-buffered hidden weight block fits,
        # then the largest batch tile that fits the remaining budget (reuse knob).
        blocks = h_p // LANE
        if self.n_tiles is not None:
            assert blocks % self.n_tiles == 0, "n_tiles must divide h_p // 128"
            n_tiles = self.n_tiles
        else:
            n_tiles = blocks
            for d in range(1, blocks + 1):
                if blocks % d:
                    continue
                if 2 * h_p * (h_p // d) * wb <= budget // 2:
                    n_tiles = d
                    break
        tile_n = h_p // n_tiles
        n_slots = 2 if n_tiles > 1 else 1
        fixed = ((fin_p * h_p + h_p * fout_p) * wb                 # resident in/out weights
                 + (h_p + n_stack * h_p + fout_p) * 4              # biases (f32)
                 + 2 * (h_p * tile_n * wb + tile_n * 4))           # double-buffered hidden blocks
        per_row = 4 * (n_slots * h_p + 2 * fin_p + 2 * fout_p)     # act slots + x/out buffers
        cap_rows = max((budget - fixed) // per_row, SUBLANE)
        tile_b = self.tile_b or min(1024, _round_up(B, SUBLANE),
                                    cap_rows // SUBLANE * SUBLANE)
        tile_b = max(_round_up(tile_b, SUBLANE), SUBLANE)
        return dict(resident=False, tile_b=tile_b, n_tiles=n_tiles, vmem_limit=vmem_limit)

    def __call__(self, x):
        B, fin = x.shape
        assert fin == self.input_features
        plan = self._plan(B)
        tile_b = plan["tile_b"]
        bp = _round_up(B, tile_b)
        x_pad = jnp.zeros((bp, self.fin_p), jnp.float32).at[:B, :fin].set(
            x.astype(jnp.float32))

        if plan["resident"]:
            out_pad = _fused_mlp_resident(
                x_pad, self.w_in, self.w_hid, self.w_out, self.b_in, self.b_hid, self.b_out,
                tile_b=tile_b, num_hidden_layers=self.num_hidden_layers,
                vmem_limit=plan["vmem_limit"])
        else:
            out_pad = _fused_mlp_stream(
                x_pad, self.w_in, self.w_hid, self.w_out, self.b_in, self.b_hid, self.b_out,
                num_layers=self.num_hidden_layers + 2, tile_b=tile_b,
                n_tiles=plan["n_tiles"], vmem_limit=plan["vmem_limit"])
        return out_pad[:B, :self.output_features]


# ----------------------------------------------------------------------------------------------
# Reference + test
# ----------------------------------------------------------------------------------------------
def _reference(x, params, weight_dtype=jnp.float32):
    """Pure-JAX reference emulating the kernel numerics (f32 accumulation; activations are cast
    to the weight dtype only as the matmul operand)."""
    out = x
    for i, (w, b) in enumerate(params):
        out = jnp.dot(out.astype(weight_dtype), w.astype(weight_dtype),
                      preferred_element_type=jnp.float32,
                      precision=jax.lax.Precision.HIGHEST) + b
        if i != len(params) - 1:
            out = jnp.maximum(out, 0.0)
    return out


if __name__ == "__main__":
    key = jax.random.PRNGKey(0)
    k1, k2, kx = jax.random.split(key, 3)

    # --- Test 1: small net, f32 weights, auto (resident) path, tight tolerance -------------
    batch, fin, n_layers, hidden, fout = 8, 16, 2, 32, 8
    net = FeedForwardNetPallas(fin, n_layers, hidden, fout, k1, weight_dtype=jnp.float32)
    x = jax.random.normal(kx, (batch, fin), jnp.float32)
    out = jax.block_until_ready(net(x))
    ref = _reference(x, net.params)
    assert out.shape == (batch, fout)
    assert jnp.allclose(out, ref, atol=2e-3, rtol=2e-3), float(jnp.max(jnp.abs(out - ref)))

    # --- Test 2: force the streamed / N-tiled path (multiple batch tiles), bf16 weights ----
    batch2, fin2, n_layers2, hidden2, fout2 = 16, 48, 3, 256, 10
    net2 = FeedForwardNetPallas(fin2, n_layers2, hidden2, fout2, k2,
                                weight_dtype=jnp.bfloat16,
                                mode="stream", n_tiles=2, tile_b=8)
    x2 = jax.random.normal(jax.random.fold_in(kx, 1), (batch2, fin2), jnp.float32)
    out2 = jax.block_until_ready(net2(x2))
    ref2 = _reference(x2, net2.params, weight_dtype=jnp.bfloat16)
    assert out2.shape == (batch2, fout2)
    assert jnp.allclose(out2, ref2, atol=3e-2, rtol=3e-2), float(jnp.max(jnp.abs(out2 - ref2)))

    print("KERNEL_OK")
</pallas_src>

<mosaic_0001>
module attributes {stable_mosaic.version = 11 : i64} {
  func.func @kernel(%arg0: i32, %arg1: memref<8x128xf32, #tpu.memory_space<vmem>>, %arg2: memref<128x128xf32, #tpu.memory_space<vmem>>, %arg3: memref<2x128x128xf32, #tpu.memory_space<vmem>>, %arg4: memref<128x128xf32, #tpu.memory_space<vmem>>, %arg5: memref<1x128xf32, #tpu.memory_space<vmem>>, %arg6: memref<2x1x128xf32, #tpu.memory_space<vmem>>, %arg7: memref<1x128xf32, #tpu.memory_space<vmem>>, %arg8: memref<8x128xf32, #tpu.memory_space<vmem>>) attributes {dimension_semantics = [#tpu.dimension_semantics<parallel>], iteration_bounds = array<i64: 1>, scalar_prefetch = 0 : i64, scratch_operands = 0 : i64, tpu.core_type = #tpu.core_type<tc>, window_params = [{transform_indices = @transform_0, window_bounds = array<i64: 8, 128>}, {pipeline_mode = #tpu.pipeline_mode<synchronous>, transform_indices = @transform_1, window_bounds = array<i64: 128, 128>}, {pipeline_mode = #tpu.pipeline_mode<synchronous>, transform_indices = @transform_2, window_bounds = array<i64: 2, 128, 128>}, {pipeline_mode = #tpu.pipeline_mode<synchronous>, transform_indices = @transform_3, window_bounds = array<i64: 128, 128>}, {pipeline_mode = #tpu.pipeline_mode<synchronous>, transform_indices = @transform_4, window_bounds = array<i64: 1, 128>}, {pipeline_mode = #tpu.pipeline_mode<synchronous>, transform_indices = @transform_5, window_bounds = array<i64: 2, 1, 128>}, {pipeline_mode = #tpu.pipeline_mode<synchronous>, transform_indices = @transform_6, window_bounds = array<i64: 1, 128>}, {transform_indices = @transform_7, window_bounds = array<i64: 8, 128>}]} {
    %c0 = arith.constant 0 : index
    %c0_0 = arith.constant 0 : index
    %0 = vector.load %arg1[%c0, %c0_0] : memref<8x128xf32, #tpu.memory_space<vmem>>, vector<8x128xf32>
    %c0_1 = arith.constant 0 : index
    %c0_2 = arith.constant 0 : index
    %1 = vector.load %arg2[%c0_1, %c0_2] : memref<128x128xf32, #tpu.memory_space<vmem>>, vector<128x128xf32>
    %cst = arith.constant dense<0.000000e+00> : vector<8x128xf32>
    %2 = tpu.matmul %0, %1, %cst {dimension_numbers = #tpu.dot_dimension_numbers<[1], [0], [0], [1], [0, 0, 1, 1], [], []>} : vector<8x128xf32>, vector<128x128xf32>, vector<8x128xf32> -> vector<8x128xf32>
    %c0_3 = arith.constant 0 : index
    %c0_4 = arith.constant 0 : index
    %3 = vector.load %arg5[%c0_3, %c0_4] : memref<1x128xf32, #tpu.memory_space<vmem>>, vector<1x128xf32>
    %4 = vector.broadcast %3 : vector<1x128xf32> to vector<8x128xf32>
    %5 = arith.addf %2, %4 : vector<8x128xf32>
    %cst_5 = arith.constant 0.000000e+00 : f32
    %6 = vector.broadcast %cst_5 : f32 to vector<8x128xf32>
    %7 = arith.maximumf %5, %6 : vector<8x128xf32>
    %c0_6 = arith.constant 0 : index
    %c0_7 = arith.constant 0 : index
    %c0_8 = arith.constant 0 : index
    %8 = vector.load %arg3[%c0_6, %c0_7, %c0_8] : memref<2x128x128xf32, #tpu.memory_space<vmem>>, vector<1x128x128xf32>
    %9 = vector.shape_cast %8 : vector<1x128x128xf32> to vector<128x128xf32>
    %cst_9 = arith.constant dense<0.000000e+00> : vector<8x128xf32>
    %10 = tpu.matmul %7, %9, %cst_9 {dimension_numbers = #tpu.dot_dimension_numbers<[1], [0], [0], [1], [0, 0, 1, 1], [], []>} : vector<8x128xf32>, vector<128x128xf32>, vector<8x128xf32> -> vector<8x128xf32>
    %c0_10 = arith.constant 0 : index
    %c0_11 = arith.constant 0 : index
    %c0_12 = arith.constant 0 : index
    %11 = vector.load %arg6[%c0_10, %c0_11, %c0_12] : memref<2x1x128xf32, #tpu.memory_space<vmem>>, vector<1x1x128xf32>
    %12 = vector.shape_cast %11 : vector<1x1x128xf32> to vector<1x128xf32>
    %13 = vector.broadcast %12 : vector<1x128xf32> to vector<8x128xf32>
    %14 = arith.addf %10, %13 : vector<8x128xf32>
    %cst_13 = arith.constant 0.000000e+00 : f32
    %15 = vector.broadcast %cst_13 : f32 to vector<8x128xf32>
    %16 = arith.maximumf %14, %15 : vector<8x128xf32>
    %c1 = arith.constant 1 : index
    %c0_14 = arith.constant 0 : index
    %c0_15 = arith.constant 0 : index
    %17 = vector.load %arg3[%c1, %c0_14, %c0_15] : memref<2x128x128xf32, #tpu.memory_space<vmem>>, vector<1x128x128xf32>
    %18 = vector.shape_cast %17 : vector<1x128x128xf32> to vector<128x128xf32>
    %cst_16 = arith.constant dense<0.000000e+00> : vector<8x128xf32>
    %19 = tpu.matmul %16, %18, %cst_16 {dimension_numbers = #tpu.dot_dimension_numbers<[1], [0], [0], [1], [0, 0, 1, 1], [], []>} : vector<8x128xf32>, vector<128x128xf32>, vector<8x128xf32> -> vector<8x128xf32>
    %c1_17 = arith.constant 1 : index
    %c0_18 = arith.constant 0 : index
    %c0_19 = arith.constant 0 : index
    %20 = vector.load %arg6[%c1_17, %c0_18, %c0_19] : memref<2x1x128xf32, #tpu.memory_space<vmem>>, vector<1x1x128xf32>
    %21 = vector.shape_cast %20 : vector<1x1x128xf32> to vector<1x128xf32>
    %22 = vector.broadcast %21 : vector<1x128xf32> to vector<8x128xf32>
    %23 = arith.addf %19, %22 : vector<8x128xf32>
    %cst_20 = arith.constant 0.000000e+00 : f32
    %24 = vector.broadcast %cst_20 : f32 to vector<8x128xf32>
    %25 = arith.maximumf %23, %24 : vector<8x128xf32>
    %c0_21 = arith.constant 0 : index
    %c0_22 = arith.constant 0 : index
    %26 = vector.load %arg4[%c0_21, %c0_22] : memref<128x128xf32, #tpu.memory_space<vmem>>, vector<128x128xf32>
    %cst_23 = arith.constant dense<0.000000e+00> : vector<8x128xf32>
    %27 = tpu.matmul %25, %26, %cst_23 {dimension_numbers = #tpu.dot_dimension_numbers<[1], [0], [0], [1], [0, 0, 1, 1], [], []>} : vector<8x128xf32>, vector<128x128xf32>, vector<8x128xf32> -> vector<8x128xf32>
    %c0_24 = arith.constant 0 : index
    %c0_25 = arith.constant 0 : index
    %28 = vector.load %arg7[%c0_24, %c0_25] : memref<1x128xf32, #tpu.memory_space<vmem>>, vector<1x128xf32>
    %29 = vector.broadcast %28 : vector<1x128xf32> to vector<8x128xf32>
    %30 = arith.addf %27, %29 : vector<8x128xf32>
    %c0_26 = arith.constant 0 : index
    %c0_27 = arith.constant 0 : index
    %31 = vector.load %arg8[%c0_26, %c0_27] : memref<8x128xf32, #tpu.memory_space<vmem>>, vector<8x128xf32>
    tpu.vector_store %arg8[%c0_26, %c0_27], %30 {strides = array<i32>} : memref<8x128xf32, #tpu.memory_space<vmem>>, vector<8x128xf32>,
    return
  }
  func.func @transform_0(%arg0: i32) -> (i32, i32) {
    %c0_i32 = arith.constant 0 : i32
    %c0_i32_0 = arith.constant 0 : i32
    return %arg0, %c0_i32 : i32, i32
  }
  func.func @transform_1(%arg0: i32) -> (i32, i32) {
    %c0_i32 = arith.constant 0 : i32
    %c0_i32_0 = arith.constant 0 : i32
    %c0_i32_1 = arith.constant 0 : i32
    return %c0_i32, %c0_i32_0 : i32, i32
  }
  func.func @transform_2(%arg0: i32) -> (i32, i32, i32) {
    %c0_i32 = arith.constant 0 : i32
    %c0_i32_0 = arith.constant 0 : i32
    %c0_i32_1 = arith.constant 0 : i32
    %c0_i32_2 = arith.constant 0 : i32
    return %c0_i32, %c0_i32_0, %c0_i32_1 : i32, i32, i32
  }
  func.func @transform_3(%arg0: i32) -> (i32, i32) {
    %c0_i32 = arith.constant 0 : i32
    %c0_i32_0 = arith.constant 0 : i32
    %c0_i32_1 = arith.constant 0 : i32
    return %c0_i32, %c0_i32_0 : i32, i32
  }
  func.func @transform_4(%arg0: i32) -> (i32, i32) {
    %c0_i32 = arith.constant 0 : i32
    %c0_i32_0 = arith.constant 0 : i32
    %c0_i32_1 = arith.constant 0 : i32
    return %c0_i32, %c0_i32_0 : i32, i32
  }
  func.func @transform_5(%arg0: i32) -> (i32, i32, i32) {
    %c0_i32 = arith.constant 0 : i32
    %c0_i32_0 = arith.constant 0 : i32
    %c0_i32_1 = arith.constant 0 : i32
    %c0_i32_2 = arith.constant 0 : i32
    return %c0_i32, %c0_i32_0, %c0_i32_1 : i32, i32, i32
  }
  func.func @transform_6(%arg0: i32) -> (i32, i32) {
    %c0_i32 = arith.constant 0 : i32
    %c0_i32_0 = arith.constant 0 : i32
    %c0_i32_1 = arith.constant 0 : i32
    return %c0_i32, %c0_i32_0 : i32, i32
  }
  func.func @transform_7(%arg0: i32) -> (i32, i32) {
    %c0_i32 = arith.constant 0 : i32
    %c0_i32_0 = arith.constant 0 : i32
    return %arg0, %c0_i32 : i32, i32
  }
}

</mosaic_0001>

<llo_original>
// kernel: tpu_custom_call.1
$region0: #{tpu_custom_call.1}
  #allocation0 [shape = 'u32[]', space=smem, size = 0x4, offset = 0x4, fixed_abs, tag = 'smem constant byte address 0x4 - core index']
  #allocation1 [shape = 'u32[144,128]{1,0:T(1,128)}', space=vmem, size = 0x12000, scoped, tag = 'internal scratch']
  %s0 = inlined_call_operand.hbm [shape: f32[8,128], index: 0, kind: input, shape index: {}]
  %s1 = inlined_call_operand.hbm [shape: f32[128,128], index: 1, kind: input, shape index: {}]
  %s2 = inlined_call_operand.hbm [shape: f32[2,128,128], index: 2, kind: input, shape index: {}]
  %s3 = inlined_call_operand.hbm [shape: f32[128,128], index: 3, kind: input, shape index: {}]
  %s4 = inlined_call_operand.vmem [shape: f32[1,128], index: 4, kind: input, shape index: {}]
  %s5 = inlined_call_operand.vmem [shape: f32[2,1,128], index: 5, kind: input, shape index: {}]
  %s6 = inlined_call_operand.vmem [shape: f32[1,128], index: 6, kind: input, shape index: {}]
  %s7 = inlined_call_operand.hbm [shape: f32[8,128], index: 7, kind: output, shape index: {}]
  %s8 = sld [smem:[#allocation0]]
  $region54: #{tpu_custom_call.1} parent=0
    _
  %s10 = ssub.s32 1, %s8
  %s11 = scalar_select 0, %s10, %s8
  $region1: #{tpu_custom_call.1} parent=0
    #allocation2 [shape = 'u8[4096]{0}', space=vmem, size = 0x1000, scoped, tag = 'input window, operand 0, single buffered']
    #allocation3 [shape = 's32[1]{0}', space=sflag, size = 0x4, scoped, tag = 'scoped memory for tpu_custom_call.1']
    #allocation4 [shape = 's32[1]{0}', space=sflag, size = 0x4, scoped, tag = 'scoped memory for tpu_custom_call.1']
    #allocation5 [shape = 'u8[65536]{0}', space=vmem, size = 0x10000, scoped, tag = 'input window, operand 1, single buffered']
    #allocation6 [shape = 's32[1]{0}', space=sflag, size = 0x4, scoped, tag = 'scoped memory for tpu_custom_call.1']
    #allocation7 [shape = 'u8[131072]{0}', space=vmem, size = 0x20000, scoped, tag = 'input window, operand 2, single buffered']
    #allocation8 [shape = 'u8[65536]{0}', space=vmem, size = 0x10000, scoped, tag = 'input window, operand 3, single buffered']
    #allocation9 [shape = 's32[1]{0}', space=sflag, size = 0x4, scoped, tag = 'scoped memory for tpu_custom_call.1']
    #allocation10 [shape = 'u8[4096]{0}', space=vmem, size = 0x1000, scoped, tag = 'output window, operand 0, single buffered']
    %12 = vsyncpa [#allocation3], 0
    %13 = vsyncpa [#allocation6], 0
    %14 = vsyncpa [#allocation9], 0
    %15 = vsyncpa [#allocation4], 0
    // Predicated region
    $region2: #{tpu_custom_call.1} parent=1 // pred_check
      _
    $region3: #{tpu_custom_call.1} parent=1 // pred_check_branch
      %17 = sbr.rel (0) target = $region5
    $region4: #{tpu_custom_call.1} parent=1 // pred_region
      %s19 = ssub.s32 128, 128
      %20 = vsyncadd [#allocation3], %s19
      %s22 = sshll.u32 [#allocation2], 4
      %s23 = int_to_ptr.vmem [resolvable:$true] %s22
      %25 = dma.hbm_to_vmem [thread:$0]  %s0, 128, %s23, [#allocation3]
    $region5: #{tpu_custom_call.1} parent=1 // pred_fallthru
      _
    // Predicated region
    $region6: #{tpu_custom_call.1} parent=1 // pred_check
      _
    $region7: #{tpu_custom_call.1} parent=1 // pred_check_branch
      %27 = sbr.rel (0) target = $region9
    $region8: #{tpu_custom_call.1} parent=1 // pred_region
      %s29 = ssub.s32 2048, 2048
      %30 = vsyncadd [#allocation6], %s29
      %s31 = sshll.u32 [#allocation5], 4
      %s32 = int_to_ptr.vmem [resolvable:$true] %s31
      %37 = dma.hbm_to_vmem [thread:$0]  %s1, 2048, %s32, [#allocation6], 128, 128, 8
    $region9: #{tpu_custom_call.1} parent=1 // pred_fallthru
      _
    // Predicated region
    $region10: #{tpu_custom_call.1} parent=1 // pred_check
      _
    $region11: #{tpu_custom_call.1} parent=1 // pred_check_branch
      %39 = sbr.rel (0) target = $region13
    $region12: #{tpu_custom_call.1} parent=1 // pred_region
      %s41 = ssub.s32 4096, 4096
      %42 = vsyncadd [#allocation6], %s41
      %s43 = sshll.u32 [#allocation7], 4
      %s44 = int_to_ptr.vmem [resolvable:$true] %s43
      %49 = dma.hbm_to_vmem [thread:$0]  %s2, 4096, %s44, [#allocation6], 128, 128, 8
    $region13: #{tpu_custom_call.1} parent=1 // pred_fallthru
      _
    // Predicated region
    $region14: #{tpu_custom_call.1} parent=1 // pred_check
      _
    $region15: #{tpu_custom_call.1} parent=1 // pred_check_branch
      %51 = sbr.rel (0) target = $region17
    $region16: #{tpu_custom_call.1} parent=1 // pred_region
      %s53 = ssub.s32 2048, 2048
      %54 = vsyncadd [#allocation9], %s53
      %s55 = sshll.u32 [#allocation8], 4
      %s56 = int_to_ptr.vmem [resolvable:$true] %s55
      %61 = dma.hbm_to_vmem [thread:$0]  %s3, 2048, %s56, [#allocation9], 128, 128, 8
    $region17: #{tpu_custom_call.1} parent=1 // pred_fallthru
      _
    // Predicated region
    $region18: #{tpu_custom_call.1} parent=1 // pred_check
      _
    $region19: #{tpu_custom_call.1} parent=1 // pred_check_branch
      %63 = sbr.rel (0) target = $region21
    $region20: #{tpu_custom_call.1} parent=1 // pred_region
      _
    $region21: #{tpu_custom_call.1} parent=1 // pred_fallthru
      _
    // Predicated region
    $region22: #{tpu_custom_call.1} parent=1 // pred_check
      _
    $region23: #{tpu_custom_call.1} parent=1 // pred_check_branch
      %65 = sbr.rel (0) target = $region25
    $region24: #{tpu_custom_call.1} parent=1 // pred_region
      _
    $region25: #{tpu_custom_call.1} parent=1 // pred_fallthru
      _
    // Predicated region
    $region26: #{tpu_custom_call.1} parent=1 // pred_check
      _
    $region27: #{tpu_custom_call.1} parent=1 // pred_check_branch
      %67 = sbr.rel (0) target = $region29
    $region28: #{tpu_custom_call.1} parent=1 // pred_region
      _
    $region29: #{tpu_custom_call.1} parent=1 // pred_fallthru
      _
    // Predicated region
    $region30: #{tpu_custom_call.1} parent=1 // pred_check
      _
    $region31: #{tpu_custom_call.1} parent=1 // pred_check_branch
      %69 = sbr.rel (0) target = $region33
    $region32: #{tpu_custom_call.1} parent=1 // pred_region
      %70 = dma.done [#allocation3], 128
    $region33: #{tpu_custom_call.1} parent=1 // pred_fallthru
      _
    // Predicated region
    $region34: #{tpu_custom_call.1} parent=1 // pred_check
      _
    $region35: #{tpu_custom_call.1} parent=1 // pred_check_branch
      %72 = sbr.rel (0) target = $region37
    $region36: #{tpu_custom_call.1} parent=1 // pred_region
      %73 = dma.done [#allocation6], 2048
    $region37: #{tpu_custom_call.1} parent=1 // pred_fallthru
      _
    // Predicated region
    $region38: #{tpu_custom_call.1} parent=1 // pred_check
      _
    $region39: #{tpu_custom_call.1} parent=1 // pred_check_branch
      %75 = sbr.rel (0) target = $region41
    $region40: #{tpu_custom_call.1} parent=1 // pred_region
      %76 = dma.done [#allocation6], 4096
    $region41: #{tpu_custom_call.1} parent=1 // pred_fallthru
      _
    // Predicated region
    $region42: #{tpu_custom_call.1} parent=1 // pred_check
      _
    $region43: #{tpu_custom_call.1} parent=1 // pred_check_branch
      %78 = sbr.rel (0) target = $region45
    $region44: #{tpu_custom_call.1} parent=1 // pred_region
      %79 = dma.done [#allocation9], 2048
    $region45: #{tpu_custom_call.1} parent=1 // pred_fallthru
      _
    %v80 = vld [vmem:[#allocation2] sm:$0xff]
    %v81 = vld [vmem:[#allocation5] sm:$0xff]
    %v82 = vld [vmem:[#allocation5 + $0x8] sm:$0xff]
    %v83 = vld [vmem:[#allocation5 + $0x10] sm:$0xff]
    %v84 = vld [vmem:[#allocation5 + $0x18] sm:$0xff]
    %v85 = vld [vmem:[#allocation5 + $0x20] sm:$0xff]
    %v86 = vld [vmem:[#allocation5 + $0x28] sm:$0xff]
    %v87 = vld [vmem:[#allocation5 + $0x30] sm:$0xff]
    %v88 = vld [vmem:[#allocation5 + $0x38] sm:$0xff]
    %v89 = vld [vmem:[#allocation5 + $0x40] sm:$0xff]
    %v90 = vld [vmem:[#allocation5 + $0x48] sm:$0xff]
    %v91 = vld [vmem:[#allocation5 + $0x50] sm:$0xff]
    %v92 = vld [vmem:[#allocation5 + $0x58] sm:$0xff]
    %v93 = vld [vmem:[#allocation5 + $0x60] sm:$0xff]
    %v94 = vld [vmem:[#allocation5 + $0x68] sm:$0xff]
    %v95 = vld [vmem:[#allocation5 + $0x70] sm:$0xff]
    %v96 = vld [vmem:[#allocation5 + $0x78] sm:$0xff]
    %v97 = vld [vmem:[%s4] sm:$0x1]
    %v99 = vlaneseq
    %v100 = vshrl.u32 %v99, 7
    %v101 = vsub.s32 0, %v100
    %v102 = vrot.slane %v97, %v101
    %104 = vmatprep.subr.mxu0 0.0
    %105 = vmatpush1.msra.mxu0 %v81
    %106 = vmatprep.subr.mxu0 0.0
    %107 = vmatpush1.msra.mxu0 %v82
    %108 = vmatprep.subr.mxu0 0.0
    %109 = vmatpush1.msra.mxu0 %v83
    %110 = vmatprep.subr.mxu0 0.0
    %111 = vmatpush1.msra.mxu0 %v84
    %112 = vmatprep.subr.mxu0 0.0
    %113 = vmatpush1.msra.mxu0 %v85
    %114 = vmatprep.subr.mxu0 0.0
    %115 = vmatpush1.msra.mxu0 %v86
    %116 = vmatprep.subr.mxu0 0.0
    %117 = vmatpush1.msra.mxu0 %v87
    %118 = vmatprep.subr.mxu0 0.0
    %119 = vmatpush1.msra.mxu0 %v88
    %120 = vmatprep.subr.mxu0 0.0
    %121 = vmatpush1.msra.mxu0 %v89
    %122 = vmatprep.subr.mxu0 0.0
    %123 = vmatpush1.msra.mxu0 %v90
    %124 = vmatprep.subr.mxu0 0.0
    %125 = vmatpush1.msra.mxu0 %v91
    %126 = vmatprep.subr.mxu0 0.0
    %127 = vmatpush1.msra.mxu0 %v92
    %128 = vmatprep.subr.mxu0 0.0
    %129 = vmatpush1.msra.mxu0 %v93
    %130 = vmatprep.subr.mxu0 0.0
    %131 = vmatpush1.msra.mxu0 %v94
    %132 = vmatprep.subr.mxu0 0.0
    %133 = vmatpush1.msra.mxu0 %v95
    %134 = vmatprep.subr.mxu0 0.0
    %135 = vmatpush1.msra.mxu0 %v96
    %136 = vmatprep.subr.mxu0 0.0
    %137 = vmatpush1.msra.mxu0 0.0
    %138 = vmatprep.subr.mxu0 0.0
    %139 = vmatpush1.msra.mxu0 0.0
    %140 = vmatprep.subr.mxu0 0.0
    %141 = vmatpush1.msra.mxu0 0.0
    %142 = vmatprep.subr.mxu0 0.0
    %143 = vmatpush1.msra.mxu0 0.0
    %144 = vmatprep.subr.mxu0 0.0
    %145 = vmatpush1.msra.mxu0 0.0
    %146 = vmatprep.subr.mxu0 0.0
    %147 = vmatpush1.msra.mxu0 0.0
    %148 = vmatprep.subr.mxu0 0.0
    %149 = vmatpush1.msra.mxu0 0.0
    %150 = vmatprep.subr.mxu0 0.0
    %151 = vmatpush1.msra.mxu0 0.0
    %152 = vmatprep.subr.mxu0 0.0
    %153 = vmatpush1.msra.mxu0 0.0
    %154 = vmatprep.subr.mxu0 0.0
    %155 = vmatpush1.msra.mxu0 0.0
    %156 = vmatprep.subr.mxu0 0.0
    %157 = vmatpush1.msra.mxu0 0.0
    %158 = vmatprep.subr.mxu0 0.0
    %159 = vmatpush1.msra.mxu0 0.0
    %160 = vmatprep.subr.mxu0 0.0
    %161 = vmatpush1.msra.mxu0 0.0
    %162 = vmatprep.subr.mxu0 0.0
    %163 = vmatpush1.msra.mxu0 0.0
    %164 = vmatprep.subr.mxu0 0.0
    %165 = vmatpush1.msra.mxu0 0.0
    %166 = vmatprep.subr.mxu0 0.0
    %167 = vmatpush1.msra.mxu0 0.0
    %168 = vmatprep.mubr.f32.mxu0 0.0
    %169 = vmatmul.mubr.f32.gmra.mrb[0].mxu0 %v80
    %v170 = vpop.f32.mrb[0].mxu0
    %v171 = vadd.f32 %v102, %v170
    %v172 = vpop.f32.mrb[0].mxu0
    %173 = vdwg.mxu0
    %v174 = vmax.f32 %v171, 0.0
    %v175 = vld [vmem:[#allocation7] sm:$0xff]
    %v176 = vld [vmem:[#allocation7 + $0x8] sm:$0xff]
    %v177 = vld [vmem:[#allocation7 + $0x10] sm:$0xff]
    %v178 = vld [vmem:[#allocation7 + $0x18] sm:$0xff]
    %v179 = vld [vmem:[#allocation7 + $0x20] sm:$0xff]
    %v180 = vld [vmem:[#allocation7 + $0x28] sm:$0xff]
    %v181 = vld [vmem:[#allocation7 + $0x30] sm:$0xff]
    %v182 = vld [vmem:[#allocation7 + $0x38] sm:$0xff]
    %v183 = vld [vmem:[#allocation7 + $0x40] sm:$0xff]
    %v184 = vld [vmem:[#allocation7 + $0x48] sm:$0xff]
    %v185 = vld [vmem:[#allocation7 + $0x50] sm:$0xff]
    %v186 = vld [vmem:[#allocation7 + $0x58] sm:$0xff]
    %v187 = vld [vmem:[#allocation7 + $0x60] sm:$0xff]
    %v188 = vld [vmem:[#allocation7 + $0x68] sm:$0xff]
    %v189 = vld [vmem:[#allocation7 + $0x70] sm:$0xff]
    %v190 = vld [vmem:[#allocation7 + $0x78] sm:$0xff]
    %v191 = vld [vmem:[%s5] sm:$0x1]
    %v193 = vlaneseq
    %v194 = vshrl.u32 %v193, 7
    %v195 = vsub.s32 0, %v194
    %v196 = vrot.slane %v191, %v195
    %198 = vmatprep.subr.mxu0 0.0
    %199 = vmatpush1.msra.mxu0 %v175
    %200 = vmatprep.subr.mxu0 0.0
    %201 = vmatpush1.msra.mxu0 %v176
    %202 = vmatprep.subr.mxu0 0.0
    %203 = vmatpush1.msra.mxu0 %v177
    %204 = vmatprep.subr.mxu0 0.0
    %205 = vmatpush1.msra.mxu0 %v178
    %206 = vmatprep.subr.mxu0 0.0
    %207 = vmatpush1.msra.mxu0 %v179
    %208 = vmatprep.subr.mxu0 0.0
    %209 = vmatpush1.msra.mxu0 %v180
    %210 = vmatprep.subr.mxu0 0.0
    %211 = vmatpush1.msra.mxu0 %v181
    %212 = vmatprep.subr.mxu0 0.0
    %213 = vmatpush1.msra.mxu0 %v182
    %214 = vmatprep.subr.mxu0 0.0
    %215 = vmatpush1.msra.mxu0 %v183
    %216 = vmatprep.subr.mxu0 0.0
    %217 = vmatpush1.msra.mxu0 %v184
    %218 = vmatprep.subr.mxu0 0.0
    %219 = vmatpush1.msra.mxu0 %v185
    %220 = vmatprep.subr.mxu0 0.0
    %221 = vmatpush1.msra.mxu0 %v186
    %222 = vmatprep.subr.mxu0 0.0
    %223 = vmatpush1.msra.mxu0 %v187
    %224 = vmatprep.subr.mxu0 0.0
    %225 = vmatpush1.msra.mxu0 %v188
    %226 = vmatprep.subr.mxu0 0.0
    %227 = vmatpush1.msra.mxu0 %v189
    %228 = vmatprep.subr.mxu0 0.0
    %229 = vmatpush1.msra.mxu0 %v190
    %230 = vmatprep.subr.mxu0 0.0
    %231 = vmatpush1.msra.mxu0 0.0
    %232 = vmatprep.subr.mxu0 0.0
    %233 = vmatpush1.msra.mxu0 0.0
    %234 = vmatprep.subr.mxu0 0.0
    %235 = vmatpush1.msra.mxu0 0.0
    %236 = vmatprep.subr.mxu0 0.0
    %237 = vmatpush1.msra.mxu0 0.0
    %238 = vmatprep.subr.mxu0 0.0
    %239 = vmatpush1.msra.mxu0 0.0
    %240 = vmatprep.subr.mxu0 0.0
    %241 = vmatpush1.msra.mxu0 0.0
    %242 = vmatprep.subr.mxu0 0.0
    %243 = vmatpush1.msra.mxu0 0.0
    %244 = vmatprep.subr.mxu0 0.0
    %245 = vmatpush1.msra.mxu0 0.0
    %246 = vmatprep.subr.mxu0 0.0
    %247 = vmatpush1.msra.mxu0 0.0
    %248 = vmatprep.subr.mxu0 0.0
    %249 = vmatpush1.msra.mxu0 0.0
    %250 = vmatprep.subr.mxu0 0.0
    %251 = vmatpush1.msra.mxu0 0.0
    %252 = vmatprep.subr.mxu0 0.0
    %253 = vmatpush1.msra.mxu0 0.0
    %254 = vmatprep.subr.mxu0 0.0
    %255 = vmatpush1.msra.mxu0 0.0
    %256 = vmatprep.subr.mxu0 0.0
    %257 = vmatpush1.msra.mxu0 0.0
    %258 = vmatprep.subr.mxu0 0.0
    %259 = vmatpush1.msra.mxu0 0.0
    %260 = vmatprep.subr.mxu0 0.0
    %261 = vmatpush1.msra.mxu0 0.0
    %262 = vmatprep.mubr.f32.mxu0 0.0
    %263 = vmatmul.mubr.f32.gmra.mrb[0].mxu0 %v174
    %v264 = vpop.f32.mrb[0].mxu0
    %v265 = vadd.f32 %v196, %v264
    %v266 = vpop.f32.mrb[0].mxu0
    %267 = vdwg.mxu0
    %v268 = vmax.f32 %v265, 0.0
    %s269 = scalar_lea.vmem [#allocation7], 128
    %v270 = vld [vmem:[%s269] sm:$0xff]
    %v271 = vld [vmem:[%s269 + $0x8] sm:$0xff]
    %v272 = vld [vmem:[%s269 + $0x10] sm:$0xff]
    %v273 = vld [vmem:[%s269 + $0x18] sm:$0xff]
    %v274 = vld [vmem:[%s269 + $0x20] sm:$0xff]
    %v275 = vld [vmem:[%s269 + $0x28] sm:$0xff]
    %v276 = vld [vmem:[%s269 + $0x30] sm:$0xff]
    %v277 = vld [vmem:[%s269 + $0x38] sm:$0xff]
    %v278 = vld [vmem:[%s269 + $0x40] sm:$0xff]
    %v279 = vld [vmem:[%s269 + $0x48] sm:$0xff]
    %v280 = vld [vmem:[%s269 + $0x50] sm:$0xff]
    %v281 = vld [vmem:[%s269 + $0x58] sm:$0xff]
    %v282 = vld [vmem:[%s269 + $0x60] sm:$0xff]
    %v283 = vld [vmem:[%s269 + $0x68] sm:$0xff]
    %v284 = vld [vmem:[%s269 + $0x70] sm:$0xff]
    %v285 = vld [vmem:[%s269 + $0x78] sm:$0xff]
    %s286 = scalar_lea.vmem %s5, 1
    %v287 = vld [vmem:[%s286] sm:$0x1]
    %v289 = vlaneseq
    %v290 = vshrl.u32 %v289, 7
    %v291 = vsub.s32 0, %v290
    %v292 = vrot.slane %v287, %v291
    %294 = vmatprep.subr.mxu0 0.0
    %295 = vmatpush1.msra.mxu0 %v270
    %296 = vmatprep.subr.mxu0 0.0
    %297 = vmatpush1.msra.mxu0 %v271
    %298 = vmatprep.subr.mxu0 0.0
    %299 = vmatpush1.msra.mxu0 %v272
    %300 = vmatprep.subr.mxu0 0.0
    %301 = vmatpush1.msra.mxu0 %v273
    %302 = vmatprep.subr.mxu0 0.0
    %303 = vmatpush1.msra.mxu0 %v274
    %304 = vmatprep.subr.mxu0 0.0
    %305 = vmatpush1.msra.mxu0 %v275
    %306 = vmatprep.subr.mxu0 0.0
    %307 = vmatpush1.msra.mxu0 %v276
    %308 = vmatprep.subr.mxu0 0.0
    %309 = vmatpush1.msra.mxu0 %v277
    %310 = vmatprep.subr.mxu0 0.0
    %311 = vmatpush1.msra.mxu0 %v278
    %312 = vmatprep.subr.mxu0 0.0
    %313 = vmatpush1.msra.mxu0 %v279
    %314 = vmatprep.subr.mxu0 0.0
    %315 = vmatpush1.msra.mxu0 %v280
    %316 = vmatprep.subr.mxu0 0.0
    %317 = vmatpush1.msra.mxu0 %v281
    %318 = vmatprep.subr.mxu0 0.0
    %319 = vmatpush1.msra.mxu0 %v282
    %320 = vmatprep.subr.mxu0 0.0
    %321 = vmatpush1.msra.mxu0 %v283
    %322 = vmatprep.subr.mxu0 0.0
    %323 = vmatpush1.msra.mxu0 %v284
    %324 = vmatprep.subr.mxu0 0.0
    %325 = vmatpush1.msra.mxu0 %v285
    %326 = vmatprep.subr.mxu0 0.0
    %327 = vmatpush1.msra.mxu0 0.0
    %328 = vmatprep.subr.mxu0 0.0
    %329 = vmatpush1.msra.mxu0 0.0
    %330 = vmatprep.subr.mxu0 0.0
    %331 = vmatpush1.msra.mxu0 0.0
    %332 = vmatprep.subr.mxu0 0.0
    %333 = vmatpush1.msra.mxu0 0.0
    %334 = vmatprep.subr.mxu0 0.0
    %335 = vmatpush1.msra.mxu0 0.0
    %336 = vmatprep.subr.mxu0 0.0
    %337 = vmatpush1.msra.mxu0 0.0
    %338 = vmatprep.subr.mxu0 0.0
    %339 = vmatpush1.msra.mxu0 0.0
    %340 = vmatprep.subr.mxu0 0.0
    %341 = vmatpush1.msra.mxu0 0.0
    %342 = vmatprep.subr.mxu0 0.0
    %343 = vmatpush1.msra.mxu0 0.0
    %344 = vmatprep.subr.mxu0 0.0
    %345 = vmatpush1.msra.mxu0 0.0
    %346 = vmatprep.subr.mxu0 0.0
    %347 = vmatpush1.msra.mxu0 0.0
    %348 = vmatprep.subr.mxu0 0.0
    %349 = vmatpush1.msra.mxu0 0.0
    %350 = vmatprep.subr.mxu0 0.0
    %351 = vmatpush1.msra.mxu0 0.0
    %352 = vmatprep.subr.mxu0 0.0
    %353 = vmatpush1.msra.mxu0 0.0
    %354 = vmatprep.subr.mxu0 0.0
    %355 = vmatpush1.msra.mxu0 0.0
    %356 = vmatprep.subr.mxu0 0.0
    %357 = vmatpush1.msra.mxu0 0.0
    %358 = vmatprep.mubr.f32.mxu0 0.0
    %359 = vmatmul.mubr.f32.gmra.mrb[0].mxu0 %v268
    %v360 = vpop.f32.mrb[0].mxu0
    %v361 = vadd.f32 %v292, %v360
    %v362 = vpop.f32.mrb[0].mxu0
    %363 = vdwg.mxu0
    %v364 = vmax.f32 %v361, 0.0
    %v365 = vld [vmem:[#allocation8] sm:$0xff]
    %v366 = vld [vmem:[#allocation8 + $0x8] sm:$0xff]
    %v367 = vld [vmem:[#allocation8 + $0x10] sm:$0xff]
    %v368 = vld [vmem:[#allocation8 + $0x18] sm:$0xff]
    %v369 = vld [vmem:[#allocation8 + $0x20] sm:$0xff]
    %v370 = vld [vmem:[#allocation8 + $0x28] sm:$0xff]
    %v371 = vld [vmem:[#allocation8 + $0x30] sm:$0xff]
    %v372 = vld [vmem:[#allocation8 + $0x38] sm:$0xff]
    %v373 = vld [vmem:[#allocation8 + $0x40] sm:$0xff]
    %v374 = vld [vmem:[#allocation8 + $0x48] sm:$0xff]
    %v375 = vld [vmem:[#allocation8 + $0x50] sm:$0xff]
    %v376 = vld [vmem:[#allocation8 + $0x58] sm:$0xff]
    %v377 = vld [vmem:[#allocation8 + $0x60] sm:$0xff]
    %v378 = vld [vmem:[#allocation8 + $0x68] sm:$0xff]
    %v379 = vld [vmem:[#allocation8 + $0x70] sm:$0xff]
    %v380 = vld [vmem:[#allocation8 + $0x78] sm:$0xff]
    %v381 = vld [vmem:[%s6] sm:$0x1]
    %v383 = vlaneseq
    %v384 = vshrl.u32 %v383, 7
    %v385 = vsub.s32 0, %v384
    %v386 = vrot.slane %v381, %v385
    %388 = vmatprep.subr.mxu0 0.0
    %389 = vmatpush1.msra.mxu0 %v365
    %390 = vmatprep.subr.mxu0 0.0
    %391 = vmatpush1.msra.mxu0 %v366
    %392 = vmatprep.subr.mxu0 0.0
    %393 = vmatpush1.msra.mxu0 %v367
    %394 = vmatprep.subr.mxu0 0.0
    %395 = vmatpush1.msra.mxu0 %v368
    %396 = vmatprep.subr.mxu0 0.0
    %397 = vmatpush1.msra.mxu0 %v369
    %398 = vmatprep.subr.mxu0 0.0
    %399 = vmatpush1.msra.mxu0 %v370
    %400 = vmatprep.subr.mxu0 0.0
    %401 = vmatpush1.msra.mxu0 %v371
    %402 = vmatprep.subr.mxu0 0.0
    %403 = vmatpush1.msra.mxu0 %v372
    %404 = vmatprep.subr.mxu0 0.0
    %405 = vmatpush1.msra.mxu0 %v373
    %406 = vmatprep.subr.mxu0 0.0
    %407 = vmatpush1.msra.mxu0 %v374
    %408 = vmatprep.subr.mxu0 0.0
    %409 = vmatpush1.msra.mxu0 %v375
    %410 = vmatprep.subr.mxu0 0.0
    %411 = vmatpush1.msra.mxu0 %v376
    %412 = vmatprep.subr.mxu0 0.0
    %413 = vmatpush1.msra.mxu0 %v377
    %414 = vmatprep.subr.mxu0 0.0
    %415 = vmatpush1.msra.mxu0 %v378
    %416 = vmatprep.subr.mxu0 0.0
    %417 = vmatpush1.msra.mxu0 %v379
    %418 = vmatprep.subr.mxu0 0.0
    %419 = vmatpush1.msra.mxu0 %v380
    %420 = vmatprep.subr.mxu0 0.0
    %421 = vmatpush1.msra.mxu0 0.0
    %422 = vmatprep.subr.mxu0 0.0
    %423 = vmatpush1.msra.mxu0 0.0
    %424 = vmatprep.subr.mxu0 0.0
    %425 = vmatpush1.msra.mxu0 0.0
    %426 = vmatprep.subr.mxu0 0.0
    %427 = vmatpush1.msra.mxu0 0.0
    %428 = vmatprep.subr.mxu0 0.0
    %429 = vmatpush1.msra.mxu0 0.0
    %430 = vmatprep.subr.mxu0 0.0
    %431 = vmatpush1.msra.mxu0 0.0
    %432 = vmatprep.subr.mxu0 0.0
    %433 = vmatpush1.msra.mxu0 0.0
    %434 = vmatprep.subr.mxu0 0.0
    %435 = vmatpush1.msra.mxu0 0.0
    %436 = vmatprep.subr.mxu0 0.0
    %437 = vmatpush1.msra.mxu0 0.0
    %438 = vmatprep.subr.mxu0 0.0
    %439 = vmatpush1.msra.mxu0 0.0
    %440 = vmatprep.subr.mxu0 0.0
    %441 = vmatpush1.msra.mxu0 0.0
    %442 = vmatprep.subr.mxu0 0.0
    %443 = vmatpush1.msra.mxu0 0.0
    %444 = vmatprep.subr.mxu0 0.0
    %445 = vmatpush1.msra.mxu0 0.0
    %446 = vmatprep.subr.mxu0 0.0
    %447 = vmatpush1.msra.mxu0 0.0
    %448 = vmatprep.subr.mxu0 0.0
    %449 = vmatpush1.msra.mxu0 0.0
    %450 = vmatprep.subr.mxu0 0.0
    %451 = vmatpush1.msra.mxu0 0.0
    %452 = vmatprep.mubr.f32.mxu0 0.0
    %453 = vmatmul.mubr.f32.gmra.mrb[0].mxu0 %v364
    %v454 = vpop.f32.mrb[0].mxu0
    %v455 = vadd.f32 %v386, %v454
    %v456 = vpop.f32.mrb[0].mxu0
    %457 = vdwg.mxu0
    %458 = vst [vmem:[#allocation10] sm:$0xff] %v455
    // Predicated region
    $region46: #{tpu_custom_call.1} parent=1 // pred_check
      _
    $region47: #{tpu_custom_call.1} parent=1 // pred_check_branch
      %460 = sbr.rel (0) target = $region49
    $region48: #{tpu_custom_call.1} parent=1 // pred_region
      %s462 = ssub.s32 128, 128
      %463 = vsyncadd [#allocation4], %s462
      %s465 = sshll.u32 [#allocation10], 4
      %s466 = int_to_ptr.vmem [resolvable:$true] %s465
      %468 = dma.vmem_to_hbm [thread:$0]  %s466, 128, %s7, [#allocation4]
    $region49: #{tpu_custom_call.1} parent=1 // pred_fallthru
      _
    // Predicated region
    $region50: #{tpu_custom_call.1} parent=1 // pred_check
      _
    $region51: #{tpu_custom_call.1} parent=1 // pred_check_branch
      %470 = sbr.rel (0) target = $region53
    $region52: #{tpu_custom_call.1} parent=1 // pred_region
      %471 = dma.done [#allocation4], 128
    $region53: #{tpu_custom_call.1} parent=1 // pred_fallthru
      _
    %472 = vsyncpa [#allocation3], 1
    %473 = vsyncpa [#allocation6], 1
    %474 = vsyncpa [#allocation9], 1
    %475 = vsyncpa [#allocation4], 1

</llo_original>
